<compile_context>
chip_gen: v7x
topology: tpu7x:2x2x1
jax: 0.10.0
libtpu: 0.0.40
codegen_flags: <defaults>
</compile_context>

<pallas_src>
import jax
import jax.numpy as jnp
from jax.experimental import pallas as pl
from jax.experimental.pallas import tpu as pltpu

_LANE = 128
_DEFAULT_VMEM_CAP = 64 * 1024 * 1024  # conservative fallback (v7x-sized) if query fails


def _add_pos_kernel(x_ref, pos_ref, o_ref):
    # x_ref/o_ref: (tb, tm) block; pos_ref: (1, tm) block -> broadcast over the batch dim.
    o_ref[...] = x_ref[...] + pos_ref[...]


def _vmem_capacity_bytes():
    try:
        return int(pltpu.get_tpu_info().vmem_capacity_bytes)
    except Exception:
        return _DEFAULT_VMEM_CAP


def _largest_divisor(total, cap, multiple):
    """Largest d with d | total, d % multiple == 0, d <= cap.  None if no such d."""
    cap = min(int(cap), int(total))
    start = cap - (cap % multiple)
    for d in range(start, 0, -multiple):
        if total % d == 0:
            return d
    return None


def positional_embeddings_forward(x: jax.Array, pos: jax.Array,
                                  *, vmem_budget_bytes=None) -> jax.Array:
    """x: (B, N, D), pos: (1, N, D) -> (B, N, D)  (out = x + pos, broadcast over B)."""
    B, N, D = x.shape
    assert pos.shape == (1, N, D)
    pos = pos.astype(x.dtype)  # explicit: the add and the store happen in x.dtype

    itemsize = jnp.dtype(x.dtype).itemsize
    M = N * D
    # Lane-dense slab: present the widest possible trailing dim to get unmasked vst.
    x2 = x.reshape(B, M)
    pos2 = pos.reshape(1, M)

    # Generation-aware VMEM budgeting (v5e/v6e: 128 MiB physical; v7x: 64 MiB).
    vmem_cap = _vmem_capacity_bytes()
    budget = vmem_budget_bytes if vmem_budget_bytes is not None else vmem_cap * 3 // 8
    budget = max(int(budget), 4 * _LANE * 8 * itemsize)
    vmem_limit = int(min(vmem_cap * 3 // 4, 100 * 1024 * 1024))

    # Sub-32-bit dtypes pack along sublanes: keep batch tiles whole packed rows.
    sub_mult = max(8, 32 // itemsize)  # 8 f32, 16 bf16, 32 int8/fp8

    # Feature-axis (lane) tile: multiple of 128 dividing M, else full M (always legal).
    if M % _LANE == 0:
        tm_cap = max(_LANE, budget // (4 * itemsize * sub_mult))
        tm = _largest_divisor(M, tm_cap, _LANE) or M
    else:
        tm = M

    # Batch-axis (sublane) tile: multiple of 8 (pref. sub_mult) within budget, or full B.
    blk_row_bytes = tm * itemsize
    tb_cap = max(1, budget // (4 * blk_row_bytes))  # x + out blocks, each double-buffered
    if B % 8 == 0:
        mult = sub_mult if B % sub_mult == 0 else 8
        tb = _largest_divisor(B, tb_cap, mult) or mult
    elif B <= tb_cap:
        tb = B                                     # full-extent leading dim: always legal
    else:
        tb = max(8, (tb_cap // 8) * 8)             # ragged last block handled by masking

    grid = (pl.cdiv(B, tb), pl.cdiv(M, tm))

    out = pl.pallas_call(
        _add_pos_kernel,
        out_shape=jax.ShapeDtypeStruct((B, M), x.dtype),
        grid_spec=pltpu.PrefetchScalarGridSpec(
            num_scalar_prefetch=0,
            grid=grid,
            in_specs=[
                pl.BlockSpec((tb, tm), lambda b, m: (b, m)),   # x: batch-tile x feature-tile
                pl.BlockSpec((1, tm), lambda b, m: (0, m)),    # pos: batch-invariant tile
            ],
            out_specs=pl.BlockSpec((tb, tm), lambda b, m: (b, m)),
        ),
        compiler_params=pltpu.CompilerParams(
            dimension_semantics=("parallel", "parallel"),
            vmem_limit_bytes=vmem_limit,
        ),
        input_output_aliases={0: 0},                           # out reuses x's slab buffer
    )(x2, pos2)
    return out.reshape(B, N, D)


class PositionalEmbeddingsPallas:
    """Mirror of the PyTorch module (forward: x + positional_embeddings)."""

    def __init__(self, image_size=32, patch_size=16, dim=32, key=None, dtype=jnp.float32):
        self.num_patches = int((image_size / patch_size) ** 2 + 1)
        self.dim = dim
        if key is None:
            key = jax.random.PRNGKey(0)
        # PyTorch init is zeros; deterministic random values here so the add is exercised.
        self.positional_embeddings = jax.random.normal(
            key, (1, self.num_patches, dim), dtype=dtype)

    def __call__(self, x: jax.Array) -> jax.Array:
        return positional_embeddings_forward(x, self.positional_embeddings)


if __name__ == "__main__":
    key = jax.random.PRNGKey(0)
    k_x, k_p, k_x2, k_p2, k_x3, k_p3 = jax.random.split(key, 6)

    # 1) Module-consistent toy config: image_size=32, patch_size=16 -> N=5, dim=32.
    #    M=160 (not %128) and B=2 (not %8) -> full-extent blocks (2,160): legal, lane-dense.
    B, image_size, patch_size, dim = 2, 32, 16, 32
    module = PositionalEmbeddingsPallas(image_size, patch_size, dim, key=k_p)
    N = module.num_patches  # 5
    x = jax.random.normal(k_x, (B, N, dim), dtype=jnp.float32)
    ref = x + module.positional_embeddings          # reference computed before aliased call
    out = jax.block_until_ready(module(x))
    assert out.shape == (B, N, dim)
    assert out.dtype == x.dtype
    assert jnp.allclose(out, ref, atol=1e-6, rtol=1e-6)

    # 2) Lane-aligned path: B=16, N=8, D=128 -> (16, 1024) slab, single big block.
    B2, N2, D2 = 16, 8, 128
    x2 = jax.random.normal(k_x2, (B2, N2, D2), dtype=jnp.float32)
    pos2 = jax.random.normal(k_p2, (1, N2, D2), dtype=jnp.float32)
    ref2 = x2 + pos2
    out2 = jax.block_until_ready(positional_embeddings_forward(x2, pos2))
    assert jnp.allclose(out2, ref2, atol=1e-6, rtol=1e-6)

    # 3) bf16 + tiny forced budget: exercises the feature-axis grid (tm=128, 4 steps).
    B3, N3, D3 = 8, 4, 128
    x3 = jax.random.normal(k_x3, (B3, N3, D3), dtype=jnp.bfloat16)
    pos3 = jax.random.normal(k_p3, (1, N3, D3), dtype=jnp.bfloat16)
    ref3 = x3 + pos3
    out3 = jax.block_until_ready(
        positional_embeddings_forward(x3, pos3, vmem_budget_bytes=16 * 1024))
    assert out3.dtype == jnp.bfloat16
    assert jnp.allclose(out3.astype(jnp.float32), ref3.astype(jnp.float32),
                        atol=1e-2, rtol=1e-2)

    print("KERNEL_OK")
</pallas_src>

<mosaic_0001>
module attributes {stable_mosaic.version = 11 : i64} {
  func.func @_add_pos_kernel(%arg0: i32, %arg1: i32, %arg2: memref<2x160xf32, #tpu.memory_space<vmem>>, %arg3: memref<1x160xf32, #tpu.memory_space<vmem>>, %arg4: memref<2x160xf32, #tpu.memory_space<vmem>>) attributes {dimension_semantics = [#tpu.dimension_semantics<parallel>, #tpu.dimension_semantics<parallel>], iteration_bounds = array<i64: 1, 1>, scalar_prefetch = 0 : i64, scratch_operands = 0 : i64, tpu.core_type = #tpu.core_type<tc>, window_params = [{transform_indices = @transform_0, window_bounds = array<i64: 2, 160>}, {transform_indices = @transform_1, window_bounds = array<i64: 1, 160>}, {transform_indices = @transform_2, window_bounds = array<i64: 2, 160>}]} {
    %c0 = arith.constant 0 : index
    %c0_0 = arith.constant 0 : index
    %0 = vector.load %arg2[%c0, %c0_0] : memref<2x160xf32, #tpu.memory_space<vmem>>, vector<2x160xf32>
    %c0_1 = arith.constant 0 : index
    %c0_2 = arith.constant 0 : index
    %1 = vector.load %arg3[%c0_1, %c0_2] : memref<1x160xf32, #tpu.memory_space<vmem>>, vector<1x160xf32>
    %2 = vector.broadcast %1 : vector<1x160xf32> to vector<2x160xf32>
    %3 = arith.addf %0, %2 : vector<2x160xf32>
    %c0_3 = arith.constant 0 : index
    %c0_4 = arith.constant 0 : index
    %4 = vector.load %arg4[%c0_3, %c0_4] : memref<2x160xf32, #tpu.memory_space<vmem>>, vector<2x160xf32>
    tpu.vector_store %arg4[%c0_3, %c0_4], %3 {strides = array<i32>} : memref<2x160xf32, #tpu.memory_space<vmem>>, vector<2x160xf32>,
    return
  }
  func.func @transform_0(%arg0: i32, %arg1: i32) -> (i32, i32) {
    %c0_i32 = arith.constant 0 : i32
    return %arg0, %arg1 : i32, i32
  }
  func.func @transform_1(%arg0: i32, %arg1: i32) -> (i32, i32) {
    %c0_i32 = arith.constant 0 : i32
    %c0_i32_0 = arith.constant 0 : i32
    return %c0_i32, %arg1 : i32, i32
  }
  func.func @transform_2(%arg0: i32, %arg1: i32) -> (i32, i32) {
    %c0_i32 = arith.constant 0 : i32
    return %arg0, %arg1 : i32, i32
  }
}

</mosaic_0001>

<llo_original>
// kernel: tpu_custom_call.1
$region0: #{tpu_custom_call.1}
  #allocation0 [shape = 'u32[]', space=smem, size = 0x4, offset = 0x4, fixed_abs, tag = 'smem constant byte address 0x4 - core index']
  #allocation1 [shape = 'u32[144,128]{1,0:T(1,128)}', space=vmem, size = 0x12000, scoped, tag = 'internal scratch']
  %s0 = inlined_call_operand.hbm [shape: f32[2,160], index: 0, kind: input, shape index: {}, may-alias: {0,2}]
  %s1 = inlined_call_operand.vmem [shape: f32[1,160], index: 1, kind: input, shape index: {}]
  %s2 = inlined_call_operand.hbm [shape: f32[2,160], index: 2, kind: output, shape index: {}, may-alias: {0,2}]
  %s3 = sld [smem:[#allocation0]]
  $region22: #{tpu_custom_call.1} parent=0
    _
  %s5 = ssub.s32 1, %s3
  %s6 = scalar_select 0, %s5, %s3
  $region1: #{tpu_custom_call.1} parent=0
    #allocation2 [shape = 'u8[2048]{0}', space=vmem, size = 0x800, scoped, tag = 'input window, operand 0, single buffered']
    #allocation3 [shape = 's32[1]{0}', space=sflag, size = 0x4, scoped, tag = 'scoped memory for tpu_custom_call.1']
    #allocation4 [shape = 's32[1]{0}', space=sflag, size = 0x4, scoped, tag = 'scoped memory for tpu_custom_call.1']
    #allocation5 [shape = 'u8[2048]{0}', space=vmem, size = 0x800, scoped, tag = 'output window, operand 0, single buffered']
    %7 = vsyncpa [#allocation3], 0
    %8 = vsyncpa [#allocation4], 0
    // Predicated region
    $region2: #{tpu_custom_call.1} parent=1 // pred_check
      _
    $region3: #{tpu_custom_call.1} parent=1 // pred_check_branch
      %10 = sbr.rel (0) target = $region5
    $region4: #{tpu_custom_call.1} parent=1 // pred_region
      %s12 = ssub.s32 64, 64
      %13 = vsyncadd [#allocation3], %s12
      %s15 = sshll.u32 [#allocation2], 4
      %s16 = int_to_ptr.vmem [resolvable:$true] %s15
      %18 = dma.hbm_to_vmem [thread:$0]  %s0, 64, %s16, [#allocation3]
    $region5: #{tpu_custom_call.1} parent=1 // pred_fallthru
      _
    // Predicated region
    $region6: #{tpu_custom_call.1} parent=1 // pred_check
      _
    $region7: #{tpu_custom_call.1} parent=1 // pred_check_branch
      %20 = sbr.rel (0) target = $region9
    $region8: #{tpu_custom_call.1} parent=1 // pred_region
      _
    $region9: #{tpu_custom_call.1} parent=1 // pred_fallthru
      _
    // Predicated region
    $region10: #{tpu_custom_call.1} parent=1 // pred_check
      _
    $region11: #{tpu_custom_call.1} parent=1 // pred_check_branch
      %22 = sbr.rel (0) target = $region13
    $region12: #{tpu_custom_call.1} parent=1 // pred_region
      %23 = dma.done [#allocation3], 64
    $region13: #{tpu_custom_call.1} parent=1 // pred_fallthru
      _
    %v24 = vld [vmem:[#allocation2] sm:$0xf]
    %v25 = vld [vmem:[%s1] sm:$0x3]
    %v27 = vlaneseq
    %v28 = vshrl.u32 %v27, 7
    %v29 = vsub.s32 0, %v28
    %v30 = vrot.slane %v25, %v29
    %v31 = vlaneseq
    %v32 = vshrl.u32 %v31, 7
    %v33 = vsub.s32 1, %v32
    %v34 = vrot.slane %v25, %v33
    %v35 = vcombine.low %v30, %v34
    %v37 = vunpack.c.l.s4 1983009808
    %v38 = vunpack.c.0.s8 %v37
    %v39 = vlaneseq
    %v40 = vshrl.u32 %v39, 7
    %v41 = vsub.s32 %v38, %v40
    %v42 = vrot.slane %v35, %v41
    %v44 = vadd.f32 %v24, %v42
    %vm45 = vcmask 1041408
    %vm46 = vcmask 257026
    %vm47 = vmor %vm46, %vm45
    %48 = vst.msk [vmem:[#allocation5] sm:$0xf] %vm47, %v44
    // Predicated region
    $region14: #{tpu_custom_call.1} parent=1 // pred_check
      _
    $region15: #{tpu_custom_call.1} parent=1 // pred_check_branch
      %50 = sbr.rel (0) target = $region17
    $region16: #{tpu_custom_call.1} parent=1 // pred_region
      %s52 = ssub.s32 64, 64
      %53 = vsyncadd [#allocation4], %s52
      %s55 = sshll.u32 [#allocation5], 4
      %s56 = int_to_ptr.vmem [resolvable:$true] %s55
      %58 = dma.vmem_to_hbm [thread:$0]  %s56, 64, %s2, [#allocation4]
    $region17: #{tpu_custom_call.1} parent=1 // pred_fallthru
      _
    // Predicated region
    $region18: #{tpu_custom_call.1} parent=1 // pred_check
      _
    $region19: #{tpu_custom_call.1} parent=1 // pred_check_branch
      %60 = sbr.rel (0) target = $region21
    $region20: #{tpu_custom_call.1} parent=1 // pred_region
      %61 = dma.done [#allocation4], 64
    $region21: #{tpu_custom_call.1} parent=1 // pred_fallthru
      _
    %62 = vsyncpa [#allocation3], 1
    %63 = vsyncpa [#allocation4], 1

</llo_original>
